<compile_context>
chip_gen: v7x
topology: tpu7x:2x2x1
jax: 0.10.0
libtpu: 0.0.40
codegen_flags: <defaults>
</compile_context>

<pallas_src>
import jax
import jax.numpy as jnp
import numpy as np
from jax.experimental import pallas as pl
from jax.experimental.pallas import tpu as pltpu

MAX_TILE_B = 512   # rows per batch tile: fills MXU M dim, amortizes grid-step cost
ROW_ALIGN = 16     # bf16 activations pack 16 rows per vreg


def _round_up(n, m):
    return ((n + m - 1) // m) * m


def _pick_batch_tiling(B):
    """Pick (tile_b, grid): 16-row-aligned tiles, <= MAX_TILE_B, small remainder
    waste, and >= 2 grid steps whenever there is more than one tile's worth of
    rows (so the 'parallel' axis shards across both v7x TensorCores)."""
    Ba = _round_up(B, ROW_ALIGN)
    n_tiles = max(pl.cdiv(Ba, MAX_TILE_B), 2 if Ba > ROW_ALIGN else 1)
    tile_b = min(_round_up(pl.cdiv(Ba, n_tiles), ROW_ALIGN), MAX_TILE_B)
    grid = pl.cdiv(B, tile_b)
    return tile_b, grid


def _mlp_kernel(x_ref,
                w1_ref, b1_ref,
                w2_ref, b2_ref,
                w3_ref, b3_ref,
                w4_ref, b4_ref,
                w5_ref, b5_ref,
                o_ref):
    """(Linear -> ReLU) x4 -> Linear(4) for one batch tile.

    x arrives as float32 straight from HBM; the bf16 cast for the MXU happens
    here (no separate wrapper pass).  K=268 is left unaligned -- Mosaic
    zero-pads the MXU feed internally.  Accumulation / bias / ReLU stay f32.
    The head stores only 4 lanes, so HBM writeback is (tile_b, 4).
    """
    def layer(h_bf16, w_ref, b_ref):
        acc = jnp.dot(h_bf16, w_ref[...], preferred_element_type=jnp.float32)
        return acc + b_ref[...]

    h = x_ref[...].astype(jnp.bfloat16)                      # in-kernel f32->bf16
    h = jnp.maximum(layer(h, w1_ref, b1_ref), 0.0).astype(jnp.bfloat16)
    h = jnp.maximum(layer(h, w2_ref, b2_ref), 0.0).astype(jnp.bfloat16)
    h = jnp.maximum(layer(h, w3_ref, b3_ref), 0.0).astype(jnp.bfloat16)
    h = jnp.maximum(layer(h, w4_ref, b4_ref), 0.0).astype(jnp.bfloat16)
    o_ref[...] = layer(h, w5_ref, b5_ref)                    # (tile_b, 4) float32


@jax.jit
def dqn_forward(x, params):
    """x: (B, ...) flattened to (B, F) float32 -> (B, 4) Q-values (float32)."""
    B = x.shape[0]
    x = x.reshape(B, -1).astype(jnp.float32)   # == x.view(B, -1).float()
    F = x.shape[1]

    (w1, b1), (w2, b2), (w3, b3), (w4, b4), (w5, b5) = params
    H = w1.shape[1]
    A = w5.shape[1]

    # Weights are tiny (<0.25 MB total): casting them to bf16 here is negligible
    # HBM traffic.  x itself is passed through untouched (f32, unpadded).
    w1b, w2b, w3b, w4b, w5b = (w.astype(jnp.bfloat16)
                               for w in (w1, w2, w3, w4, w5))
    b1f, b2f, b3f, b4f, b5f = (b.astype(jnp.float32)
                               for b in (b1, b2, b3, b4, b5))

    tile_b, grid = _pick_batch_tiling(B)

    def _full(shape):
        # Constant block index -> fetched once, resident in VMEM across the grid
        # (the pipeline does not re-DMA blocks whose index never changes).
        return pl.BlockSpec(shape, lambda i: (0, 0))

    flops = 2 * B * (F * H + 3 * H * H + H * A)
    weight_bytes = 2 * (F * H + 3 * H * H + H * A) + 4 * (4 * H + A)
    bytes_accessed = B * F * 4 + B * A * 4 + weight_bytes

    out = pl.pallas_call(
        _mlp_kernel,
        out_shape=jax.ShapeDtypeStruct((B, A), jnp.float32),
        grid_spec=pltpu.PrefetchScalarGridSpec(
            num_scalar_prefetch=0,
            grid=(grid,),
            in_specs=[
                pl.BlockSpec((tile_b, F), lambda i: (i, 0)),   # x tile, f32
                _full((F, H)), _full((1, H)),                  # layer 1
                _full((H, H)), _full((1, H)),                  # layer 2
                _full((H, H)), _full((1, H)),                  # layer 3
                _full((H, H)), _full((1, H)),                  # layer 4
                _full((H, A)), _full((1, A)),                  # head (4 lanes)
            ],
            out_specs=pl.BlockSpec((tile_b, A), lambda i: (i, 0)),
        ),
        compiler_params=pltpu.CompilerParams(
            dimension_semantics=("parallel",)),
        cost_estimate=pl.CostEstimate(
            flops=flops, transcendentals=0, bytes_accessed=bytes_accessed),
    )(x, w1b, b1f, w2b, b2f, w3b, b3f, w4b, b4f, w5b, b5f)

    return out


def init_dqn_params(key, input_features, layer_size, n_actions=4):
    """Deterministic init matching PyTorch nn.Linear default U(-1/sqrt(fan_in), +)."""
    dims = [input_features, layer_size, layer_size, layer_size, layer_size,
            n_actions]
    params = []
    for fan_in, fan_out in zip(dims[:-1], dims[1:]):
        key, kw, kb = jax.random.split(key, 3)
        bound = 1.0 / np.sqrt(fan_in)
        w = jax.random.uniform(kw, (fan_in, fan_out), jnp.float32,
                               minval=-bound, maxval=bound)
        b = jax.random.uniform(kb, (1, fan_out), jnp.float32,
                               minval=-bound, maxval=bound)
        params.append((w, b))
    return params


def dqn_forward_ref(x, params):
    """Plain-JAX float32 reference (mirrors the PyTorch nn.Sequential)."""
    h = x.reshape(x.shape[0], -1).astype(jnp.float32)
    for i, (w, b) in enumerate(params):
        h = h @ w + b
        if i < len(params) - 1:
            h = jnp.maximum(h, 0.0)
    return h


if __name__ == "__main__":
    # specs: max_val=4, height=8, width=8, layer_size=128
    specs = {"max_val": 4, "height": 8, "width": 8, "layer_size": 128}
    n_actions = 4
    n_extra_features = 12
    input_features = (specs["max_val"] * specs["height"] * specs["width"]
                      + n_extra_features)          # 4*8*8 + 12 = 268
    batch = 2

    key = jax.random.PRNGKey(0)
    key, kx = jax.random.split(key)
    x = jax.random.normal(kx, (batch, input_features), jnp.float32)

    params = init_dqn_params(jax.random.PRNGKey(0), input_features,
                             specs["layer_size"], n_actions)

    out = dqn_forward(x, params)
    out = jax.block_until_ready(out)

    # bf16 matmul operands with f32 accumulation -> loosened tolerance vs f32 ref.
    ref = dqn_forward_ref(x, params)
    np.testing.assert_allclose(np.asarray(out), np.asarray(ref),
                               rtol=5e-2, atol=5e-2)

    assert out.shape == (batch, n_actions)
    print("KERNEL_OK")
</pallas_src>

<mosaic_0001>
module attributes {stable_mosaic.version = 11 : i64} {
  func.func @_mlp_kernel(%arg0: i32, %arg1: memref<16x268xf32, #tpu.memory_space<vmem>>, %arg2: memref<268x128xbf16, #tpu.memory_space<vmem>>, %arg3: memref<1x128xf32, #tpu.memory_space<vmem>>, %arg4: memref<128x128xbf16, #tpu.memory_space<vmem>>, %arg5: memref<1x128xf32, #tpu.memory_space<vmem>>, %arg6: memref<128x128xbf16, #tpu.memory_space<vmem>>, %arg7: memref<1x128xf32, #tpu.memory_space<vmem>>, %arg8: memref<128x128xbf16, #tpu.memory_space<vmem>>, %arg9: memref<1x128xf32, #tpu.memory_space<vmem>>, %arg10: memref<128x4xbf16, #tpu.memory_space<vmem>>, %arg11: memref<1x4xf32, #tpu.memory_space<vmem>>, %arg12: memref<16x4xf32, #tpu.memory_space<vmem>>) attributes {dimension_semantics = [#tpu.dimension_semantics<parallel>], iteration_bounds = array<i64: 1>, scalar_prefetch = 0 : i64, scratch_operands = 0 : i64, tpu.core_type = #tpu.core_type<tc>, window_params = [{transform_indices = @transform_0, window_bounds = array<i64: 16, 268>}, {pipeline_mode = #tpu.pipeline_mode<synchronous>, transform_indices = @transform_1, window_bounds = array<i64: 268, 128>}, {pipeline_mode = #tpu.pipeline_mode<synchronous>, transform_indices = @transform_2, window_bounds = array<i64: 1, 128>}, {pipeline_mode = #tpu.pipeline_mode<synchronous>, transform_indices = @transform_3, window_bounds = array<i64: 128, 128>}, {pipeline_mode = #tpu.pipeline_mode<synchronous>, transform_indices = @transform_4, window_bounds = array<i64: 1, 128>}, {pipeline_mode = #tpu.pipeline_mode<synchronous>, transform_indices = @transform_5, window_bounds = array<i64: 128, 128>}, {pipeline_mode = #tpu.pipeline_mode<synchronous>, transform_indices = @transform_6, window_bounds = array<i64: 1, 128>}, {pipeline_mode = #tpu.pipeline_mode<synchronous>, transform_indices = @transform_7, window_bounds = array<i64: 128, 128>}, {pipeline_mode = #tpu.pipeline_mode<synchronous>, transform_indices = @transform_8, window_bounds = array<i64: 1, 128>}, {pipeline_mode = #tpu.pipeline_mode<synchronous>, transform_indices = @transform_9, window_bounds = array<i64: 128, 4>}, {pipeline_mode = #tpu.pipeline_mode<synchronous>, transform_indices = @transform_10, window_bounds = array<i64: 1, 4>}, {transform_indices = @transform_11, window_bounds = array<i64: 16, 4>}]} {
    %c0 = arith.constant 0 : index
    %c0_0 = arith.constant 0 : index
    %0 = vector.load %arg1[%c0, %c0_0] : memref<16x268xf32, #tpu.memory_space<vmem>>, vector<16x268xf32>
    %1 = arith.truncf %0 : vector<16x268xf32> to vector<16x268xbf16>
    %c0_1 = arith.constant 0 : index
    %c0_2 = arith.constant 0 : index
    %2 = vector.load %arg2[%c0_1, %c0_2] : memref<268x128xbf16, #tpu.memory_space<vmem>>, vector<268x128xbf16>
    %cst = arith.constant dense<0.000000e+00> : vector<16x128xf32>
    %3 = tpu.matmul %1, %2, %cst {dimension_numbers = #tpu.dot_dimension_numbers<[1], [0], [0], [1], [0, 0, 1, 1], [], []>} : vector<16x268xbf16>, vector<268x128xbf16>, vector<16x128xf32> -> vector<16x128xf32>
    %c0_3 = arith.constant 0 : index
    %c0_4 = arith.constant 0 : index
    %4 = vector.load %arg3[%c0_3, %c0_4] : memref<1x128xf32, #tpu.memory_space<vmem>>, vector<1x128xf32>
    %5 = vector.broadcast %4 : vector<1x128xf32> to vector<16x128xf32>
    %6 = arith.addf %3, %5 : vector<16x128xf32>
    %cst_5 = arith.constant 0.000000e+00 : f32
    %7 = vector.broadcast %cst_5 : f32 to vector<16x128xf32>
    %8 = arith.maximumf %6, %7 : vector<16x128xf32>
    %9 = arith.truncf %8 : vector<16x128xf32> to vector<16x128xbf16>
    %c0_6 = arith.constant 0 : index
    %c0_7 = arith.constant 0 : index
    %10 = vector.load %arg4[%c0_6, %c0_7] : memref<128x128xbf16, #tpu.memory_space<vmem>>, vector<128x128xbf16>
    %cst_8 = arith.constant dense<0.000000e+00> : vector<16x128xf32>
    %11 = tpu.matmul %9, %10, %cst_8 {dimension_numbers = #tpu.dot_dimension_numbers<[1], [0], [0], [1], [0, 0, 1, 1], [], []>} : vector<16x128xbf16>, vector<128x128xbf16>, vector<16x128xf32> -> vector<16x128xf32>
    %c0_9 = arith.constant 0 : index
    %c0_10 = arith.constant 0 : index
    %12 = vector.load %arg5[%c0_9, %c0_10] : memref<1x128xf32, #tpu.memory_space<vmem>>, vector<1x128xf32>
    %13 = vector.broadcast %12 : vector<1x128xf32> to vector<16x128xf32>
    %14 = arith.addf %11, %13 : vector<16x128xf32>
    %cst_11 = arith.constant 0.000000e+00 : f32
    %15 = vector.broadcast %cst_11 : f32 to vector<16x128xf32>
    %16 = arith.maximumf %14, %15 : vector<16x128xf32>
    %17 = arith.truncf %16 : vector<16x128xf32> to vector<16x128xbf16>
    %c0_12 = arith.constant 0 : index
    %c0_13 = arith.constant 0 : index
    %18 = vector.load %arg6[%c0_12, %c0_13] : memref<128x128xbf16, #tpu.memory_space<vmem>>, vector<128x128xbf16>
    %cst_14 = arith.constant dense<0.000000e+00> : vector<16x128xf32>
    %19 = tpu.matmul %17, %18, %cst_14 {dimension_numbers = #tpu.dot_dimension_numbers<[1], [0], [0], [1], [0, 0, 1, 1], [], []>} : vector<16x128xbf16>, vector<128x128xbf16>, vector<16x128xf32> -> vector<16x128xf32>
    %c0_15 = arith.constant 0 : index
    %c0_16 = arith.constant 0 : index
    %20 = vector.load %arg7[%c0_15, %c0_16] : memref<1x128xf32, #tpu.memory_space<vmem>>, vector<1x128xf32>
    %21 = vector.broadcast %20 : vector<1x128xf32> to vector<16x128xf32>
    %22 = arith.addf %19, %21 : vector<16x128xf32>
    %cst_17 = arith.constant 0.000000e+00 : f32
    %23 = vector.broadcast %cst_17 : f32 to vector<16x128xf32>
    %24 = arith.maximumf %22, %23 : vector<16x128xf32>
    %25 = arith.truncf %24 : vector<16x128xf32> to vector<16x128xbf16>
    %c0_18 = arith.constant 0 : index
    %c0_19 = arith.constant 0 : index
    %26 = vector.load %arg8[%c0_18, %c0_19] : memref<128x128xbf16, #tpu.memory_space<vmem>>, vector<128x128xbf16>
    %cst_20 = arith.constant dense<0.000000e+00> : vector<16x128xf32>
    %27 = tpu.matmul %25, %26, %cst_20 {dimension_numbers = #tpu.dot_dimension_numbers<[1], [0], [0], [1], [0, 0, 1, 1], [], []>} : vector<16x128xbf16>, vector<128x128xbf16>, vector<16x128xf32> -> vector<16x128xf32>
    %c0_21 = arith.constant 0 : index
    %c0_22 = arith.constant 0 : index
    %28 = vector.load %arg9[%c0_21, %c0_22] : memref<1x128xf32, #tpu.memory_space<vmem>>, vector<1x128xf32>
    %29 = vector.broadcast %28 : vector<1x128xf32> to vector<16x128xf32>
    %30 = arith.addf %27, %29 : vector<16x128xf32>
    %cst_23 = arith.constant 0.000000e+00 : f32
    %31 = vector.broadcast %cst_23 : f32 to vector<16x128xf32>
    %32 = arith.maximumf %30, %31 : vector<16x128xf32>
    %33 = arith.truncf %32 : vector<16x128xf32> to vector<16x128xbf16>
    %c0_24 = arith.constant 0 : index
    %c0_25 = arith.constant 0 : index
    %34 = vector.load %arg10[%c0_24, %c0_25] : memref<128x4xbf16, #tpu.memory_space<vmem>>, vector<128x4xbf16>
    %cst_26 = arith.constant dense<0.000000e+00> : vector<16x4xf32>
    %35 = tpu.matmul %33, %34, %cst_26 {dimension_numbers = #tpu.dot_dimension_numbers<[1], [0], [0], [1], [0, 0, 1, 1], [], []>} : vector<16x128xbf16>, vector<128x4xbf16>, vector<16x4xf32> -> vector<16x4xf32>
    %c0_27 = arith.constant 0 : index
    %c0_28 = arith.constant 0 : index
    %36 = vector.load %arg11[%c0_27, %c0_28] : memref<1x4xf32, #tpu.memory_space<vmem>>, vector<1x4xf32>
    %37 = vector.broadcast %36 : vector<1x4xf32> to vector<16x4xf32>
    %38 = arith.addf %35, %37 : vector<16x4xf32>
    %c0_29 = arith.constant 0 : index
    %c0_30 = arith.constant 0 : index
    %39 = vector.load %arg12[%c0_29, %c0_30] : memref<16x4xf32, #tpu.memory_space<vmem>>, vector<16x4xf32>
    tpu.vector_store %arg12[%c0_29, %c0_30], %38 {strides = array<i32>} : memref<16x4xf32, #tpu.memory_space<vmem>>, vector<16x4xf32>,
    return
  }
  func.func @transform_0(%arg0: i32) -> (i32, i32) {
    %c0_i32 = arith.constant 0 : i32
    %c0_i32_0 = arith.constant 0 : i32
    return %arg0, %c0_i32 : i32, i32
  }
  func.func @transform_1(%arg0: i32) -> (i32, i32) {
    %c0_i32 = arith.constant 0 : i32
    %c0_i32_0 = arith.constant 0 : i32
    %c0_i32_1 = arith.constant 0 : i32
    return %c0_i32, %c0_i32_0 : i32, i32
  }
  func.func @transform_2(%arg0: i32) -> (i32, i32) {
    %c0_i32 = arith.constant 0 : i32
    %c0_i32_0 = arith.constant 0 : i32
    %c0_i32_1 = arith.constant 0 : i32
    return %c0_i32, %c0_i32_0 : i32, i32
  }
  func.func @transform_3(%arg0: i32) -> (i32, i32) {
    %c0_i32 = arith.constant 0 : i32
    %c0_i32_0 = arith.constant 0 : i32
    %c0_i32_1 = arith.constant 0 : i32
    return %c0_i32, %c0_i32_0 : i32, i32
  }
  func.func @transform_4(%arg0: i32) -> (i32, i32) {
    %c0_i32 = arith.constant 0 : i32
    %c0_i32_0 = arith.constant 0 : i32
    %c0_i32_1 = arith.constant 0 : i32
    return %c0_i32, %c0_i32_0 : i32, i32
  }
  func.func @transform_5(%arg0: i32) -> (i32, i32) {
    %c0_i32 = arith.constant 0 : i32
    %c0_i32_0 = arith.constant 0 : i32
    %c0_i32_1 = arith.constant 0 : i32
    return %c0_i32, %c0_i32_0 : i32, i32
  }
  func.func @transform_6(%arg0: i32) -> (i32, i32) {
    %c0_i32 = arith.constant 0 : i32
    %c0_i32_0 = arith.constant 0 : i32
    %c0_i32_1 = arith.constant 0 : i32
    return %c0_i32, %c0_i32_0 : i32, i32
  }
  func.func @transform_7(%arg0: i32) -> (i32, i32) {
    %c0_i32 = arith.constant 0 : i32
    %c0_i32_0 = arith.constant 0 : i32
    %c0_i32_1 = arith.constant 0 : i32
    return %c0_i32, %c0_i32_0 : i32, i32
  }
  func.func @transform_8(%arg0: i32) -> (i32, i32) {
    %c0_i32 = arith.constant 0 : i32
    %c0_i32_0 = arith.constant 0 : i32
    %c0_i32_1 = arith.constant 0 : i32
    return %c0_i32, %c0_i32_0 : i32, i32
  }
  func.func @transform_9(%arg0: i32) -> (i32, i32) {
    %c0_i32 = arith.constant 0 : i32
    %c0_i32_0 = arith.constant 0 : i32
    %c0_i32_1 = arith.constant 0 : i32
    return %c0_i32, %c0_i32_0 : i32, i32
  }
  func.func @transform_10(%arg0: i32) -> (i32, i32) {
    %c0_i32 = arith.constant 0 : i32
    %c0_i32_0 = arith.constant 0 : i32
    %c0_i32_1 = arith.constant 0 : i32
    return %c0_i32, %c0_i32_0 : i32, i32
  }
  func.func @transform_11(%arg0: i32) -> (i32, i32) {
    %c0_i32 = arith.constant 0 : i32
    %c0_i32_0 = arith.constant 0 : i32
    return %arg0, %c0_i32 : i32, i32
  }
}

</mosaic_0001>

<llo_original>
// kernel: dqn_forward.1
$region0: #{dqn_forward.1}
  #allocation0 [shape = 'u32[]', space=smem, size = 0x4, offset = 0x4, fixed_abs, tag = 'smem constant byte address 0x4 - core index']
  #allocation1 [shape = 'u32[144,128]{1,0:T(1,128)}', space=vmem, size = 0x12000, scoped, tag = 'internal scratch']
  %s0 = inlined_call_operand.vmem [shape: f32[2,268], index: 0, kind: input, shape index: {}]
  %s1 = inlined_call_operand.vmem [shape: bf16[268,128], index: 1, kind: input, shape index: {}]
  %s2 = inlined_call_operand.vmem [shape: f32[1,128], index: 2, kind: input, shape index: {}]
  %s3 = inlined_call_operand.vmem [shape: bf16[128,128], index: 3, kind: input, shape index: {}]
  %s4 = inlined_call_operand.vmem [shape: f32[1,128], index: 4, kind: input, shape index: {}]
  %s5 = inlined_call_operand.vmem [shape: bf16[128,128], index: 5, kind: input, shape index: {}]
  %s6 = inlined_call_operand.vmem [shape: f32[1,128], index: 6, kind: input, shape index: {}]
  %s7 = inlined_call_operand.vmem [shape: bf16[128,128], index: 7, kind: input, shape index: {}]
  %s8 = inlined_call_operand.vmem [shape: f32[1,128], index: 8, kind: input, shape index: {}]
  %s9 = inlined_call_operand.vmem [shape: bf16[128,4], index: 9, kind: input, shape index: {}]
  %s10 = inlined_call_operand.vmem [shape: f32[1,4], index: 10, kind: input, shape index: {}]
  %s11 = inlined_call_operand.hbm [shape: f32[2,4], index: 11, kind: output, shape index: {}]
  %s12 = sld [smem:[#allocation0]]
  $region54: #{dqn_forward.1} parent=0
    _
  %s14 = ssub.s32 1, %s12
  %s15 = scalar_select 0, %s14, %s12
  $region1: #{dqn_forward.1} parent=0
    #allocation2 [shape = 'u8[8192]{0}', space=vmem, size = 0x2000, scoped, tag = 'output window, operand 0, single buffered']
    #allocation3 [shape = 's32[1]{0}', space=sflag, size = 0x4, scoped, tag = 'scoped memory for dqn_forward.1']
    %16 = vsyncpa [#allocation3], 0
    // Predicated region
    $region2: #{dqn_forward.1} parent=1 // pred_check
      _
    $region3: #{dqn_forward.1} parent=1 // pred_check_branch
      %18 = sbr.rel (0) target = $region5
    $region4: #{dqn_forward.1} parent=1 // pred_region
      _
    $region5: #{dqn_forward.1} parent=1 // pred_fallthru
      _
    // Predicated region
    $region6: #{dqn_forward.1} parent=1 // pred_check
      _
    $region7: #{dqn_forward.1} parent=1 // pred_check_branch
      %20 = sbr.rel (0) target = $region9
    $region8: #{dqn_forward.1} parent=1 // pred_region
      _
    $region9: #{dqn_forward.1} parent=1 // pred_fallthru
      _
    // Predicated region
    $region10: #{dqn_forward.1} parent=1 // pred_check
      _
    $region11: #{dqn_forward.1} parent=1 // pred_check_branch
      %22 = sbr.rel (0) target = $region13
    $region12: #{dqn_forward.1} parent=1 // pred_region
      _
    $region13: #{dqn_forward.1} parent=1 // pred_fallthru
      _
    // Predicated region
    $region14: #{dqn_forward.1} parent=1 // pred_check
      _
    $region15: #{dqn_forward.1} parent=1 // pred_check_branch
      %24 = sbr.rel (0) target = $region17
    $region16: #{dqn_forward.1} parent=1 // pred_region
      _
    $region17: #{dqn_forward.1} parent=1 // pred_fallthru
      _
    // Predicated region
    $region18: #{dqn_forward.1} parent=1 // pred_check
      _
    $region19: #{dqn_forward.1} parent=1 // pred_check_branch
      %26 = sbr.rel (0) target = $region21
    $region20: #{dqn_forward.1} parent=1 // pred_region
      _
    $region21: #{dqn_forward.1} parent=1 // pred_fallthru
      _
    // Predicated region
    $region22: #{dqn_forward.1} parent=1 // pred_check
      _
    $region23: #{dqn_forward.1} parent=1 // pred_check_branch
      %28 = sbr.rel (0) target = $region25
    $region24: #{dqn_forward.1} parent=1 // pred_region
      _
    $region25: #{dqn_forward.1} parent=1 // pred_fallthru
      _
    // Predicated region
    $region26: #{dqn_forward.1} parent=1 // pred_check
      _
    $region27: #{dqn_forward.1} parent=1 // pred_check_branch
      %30 = sbr.rel (0) target = $region29
    $region28: #{dqn_forward.1} parent=1 // pred_region
      _
    $region29: #{dqn_forward.1} parent=1 // pred_fallthru
      _
    // Predicated region
    $region30: #{dqn_forward.1} parent=1 // pred_check
      _
    $region31: #{dqn_forward.1} parent=1 // pred_check_branch
      %32 = sbr.rel (0) target = $region33
    $region32: #{dqn_forward.1} parent=1 // pred_region
      _
    $region33: #{dqn_forward.1} parent=1 // pred_fallthru
      _
    // Predicated region
    $region34: #{dqn_forward.1} parent=1 // pred_check
      _
    $region35: #{dqn_forward.1} parent=1 // pred_check_branch
      %34 = sbr.rel (0) target = $region37
    $region36: #{dqn_forward.1} parent=1 // pred_region
      _
    $region37: #{dqn_forward.1} parent=1 // pred_fallthru
      _
    // Predicated region
    $region38: #{dqn_forward.1} parent=1 // pred_check
      _
    $region39: #{dqn_forward.1} parent=1 // pred_check_branch
      %36 = sbr.rel (0) target = $region41
    $region40: #{dqn_forward.1} parent=1 // pred_region
      _
    $region41: #{dqn_forward.1} parent=1 // pred_fallthru
      _
    // Predicated region
    $region42: #{dqn_forward.1} parent=1 // pred_check
      _
    $region43: #{dqn_forward.1} parent=1 // pred_check_branch
      %38 = sbr.rel (0) target = $region45
    $region44: #{dqn_forward.1} parent=1 // pred_region
      _
    $region45: #{dqn_forward.1} parent=1 // pred_fallthru
      _
    %v40 = vld [vmem:[%s0] sm:$0x3f]
    %v41 = vld [vmem:[%s0 + $0x6] sm:$0x3f]
    %v42 = vld [vmem:[%s0 + $0xc] sm:$0x3f]
    %v43 = vld [vmem:[%s0 + $0x12] sm:$0x3f]
    %v44 = vld [vmem:[%s0 + $0x18] sm:$0x3f]
    %v45 = vld [vmem:[%s0 + $0x1e] sm:$0x3f]
    %v46 = vld [vmem:[%s0 + $0x24] sm:$0x3f]
    %v47 = vld [vmem:[%s0 + $0x2a] sm:$0x3f]
    %v56 = vcombine.low %v40, %v41
    %v57 = vcombine.high %v40, %v41
    %v58 = vcombine.low %v42, %v43
    %v59 = vcombine.high %v42, %v43
    %v61 = vunpack.c.l.s4 1983009808
    %v62 = vunpack.c.0.s8 %v61
    %v63 = vlaneseq
    %v64 = vshrl.u32 %v63, 7
    %v65 = vsub.s32 %v62, %v64
    %v66 = vrot.slane %v56, %v65
    %v68 = vunpack.c.l.s4 1983009808
    %v69 = vunpack.c.0.s8 %v68
    %v70 = vlaneseq
    %v71 = vshrl.u32 %v70, 7
    %v72 = vsub.s32 %v69, %v71
    %v73 = vrot.slane %v57, %v72
    %v75 = vunpack.c.l.s4 1983009808
    %v76 = vunpack.c.0.s8 %v75
    %v77 = vlaneseq
    %v78 = vshrl.u32 %v77, 7
    %v79 = vsub.s32 %v76, %v78
    %v80 = vrot.slane %v58, %v79
    %v82 = vunpack.c.l.s4 1983009808
    %v83 = vunpack.c.0.s8 %v82
    %v84 = vlaneseq
    %v85 = vshrl.u32 %v84, 7
    %v86 = vsub.s32 %v83, %v85
    %v87 = vrot.slane %v59, %v86
    %v88 = vcombine.low %v66, %v80
    %v89 = vcombine.high %v66, %v80
    %v90 = vcombine.low %v73, %v87
    %v91 = vcombine.low %v44, %v45
    %v92 = vcombine.high %v44, %v45
    %v93 = vcombine.low %v46, %v47
    %v94 = vcombine.high %v46, %v47
    %v96 = vunpack.c.l.s4 1983009808
    %v97 = vunpack.c.0.s8 %v96
    %v98 = vlaneseq
    %v99 = vshrl.u32 %v98, 7
    %v100 = vsub.s32 %v97, %v99
    %v101 = vrot.slane %v91, %v100
    %v103 = vunpack.c.l.s4 1983009808
    %v104 = vunpack.c.0.s8 %v103
    %v105 = vlaneseq
    %v106 = vshrl.u32 %v105, 7
    %v107 = vsub.s32 %v104, %v106
    %v108 = vrot.slane %v92, %v107
    %v110 = vunpack.c.l.s4 1983009808
    %v111 = vunpack.c.0.s8 %v110
    %v112 = vlaneseq
    %v113 = vshrl.u32 %v112, 7
    %v114 = vsub.s32 %v111, %v113
    %v115 = vrot.slane %v93, %v114
    %v117 = vunpack.c.l.s4 1983009808
    %v118 = vunpack.c.0.s8 %v117
    %v119 = vlaneseq
    %v120 = vshrl.u32 %v119, 7
    %v121 = vsub.s32 %v118, %v120
    %v122 = vrot.slane %v94, %v121
    %v123 = vcombine.low %v101, %v115
    %v124 = vcombine.high %v101, %v115
    %v125 = vcombine.low %v108, %v122
    %v132 = vpack.c.bf16 %v123, %v88
    %v133 = vpack.c.bf16 %v124, %v89
    %v134 = vpack.c.bf16 %v125, %v90
    %v135 = vld [vmem:[%s1] sm:$0xf]
    %v136 = vld [vmem:[%s1 + $0x4] sm:$0xf]
    %v137 = vld [vmem:[%s1 + $0x8] sm:$0xf]
    %v138 = vld [vmem:[%s1 + $0xc] sm:$0xf]
    %v139 = vld [vmem:[%s1 + $0x10] sm:$0xf]
    %v140 = vld [vmem:[%s1 + $0x14] sm:$0xf]
    %v141 = vld [vmem:[%s1 + $0x18] sm:$0xf]
    %v142 = vld [vmem:[%s1 + $0x1c] sm:$0xf]
    %v143 = vld [vmem:[%s1 + $0x20] sm:$0xf]
    %v144 = vld [vmem:[%s1 + $0x24] sm:$0xf]
    %v145 = vld [vmem:[%s1 + $0x28] sm:$0xf]
    %v146 = vld [vmem:[%s1 + $0x2c] sm:$0xf]
    %v147 = vld [vmem:[%s1 + $0x30] sm:$0xf]
    %v148 = vld [vmem:[%s1 + $0x34] sm:$0xf]
    %v149 = vld [vmem:[%s1 + $0x38] sm:$0xf]
    %v150 = vld [vmem:[%s1 + $0x3c] sm:$0xf]
    %v151 = vld [vmem:[%s1 + $0x40] sm:$0xf]
    %v152 = vld [vmem:[%s1 + $0x44] sm:$0xf]
    %v153 = vld [vmem:[%s1 + $0x48] sm:$0xf]
    %v154 = vld [vmem:[%s1 + $0x4c] sm:$0xf]
    %v155 = vld [vmem:[%s1 + $0x50] sm:$0xf]
    %v156 = vld [vmem:[%s1 + $0x54] sm:$0xf]
    %v157 = vld [vmem:[%s1 + $0x58] sm:$0xf]
    %v158 = vld [vmem:[%s1 + $0x5c] sm:$0xf]
    %v159 = vld [vmem:[%s1 + $0x60] sm:$0xf]
    %v160 = vld [vmem:[%s1 + $0x64] sm:$0xf]
    %v161 = vld [vmem:[%s1 + $0x68] sm:$0xf]
    %v162 = vld [vmem:[%s1 + $0x6c] sm:$0xf]
    %v163 = vld [vmem:[%s1 + $0x70] sm:$0xf]
    %v164 = vld [vmem:[%s1 + $0x74] sm:$0xf]
    %v165 = vld [vmem:[%s1 + $0x78] sm:$0xf]
    %v166 = vld [vmem:[%s1 + $0x7c] sm:$0xf]
    %v167 = vld [vmem:[%s1 + $0x80] sm:$0xf]
    %v168 = vld [vmem:[%s1 + $0x84] sm:$0x3]
    %v169 = vld [vmem:[%s2] sm:$0x1]
    %v171 = vlaneseq
    %v172 = vshrl.u32 %v171, 7
    %v173 = vsub.s32 0, %v172
    %v174 = vrot.slane %v169, %v173
    %v210 = vunpack.c.l.b16 %v135
    %v211 = vunpack.c.l.b16 %v136
    %v212 = vunpack.c.l.b16 %v137
    %v213 = vunpack.c.l.b16 %v138
    %v214 = vunpack.c.l.b16 %v139
    %v215 = vunpack.c.l.b16 %v140
    %v216 = vunpack.c.l.b16 %v141
    %v217 = vunpack.c.l.b16 %v142
    %v218 = vunpack.c.l.b16 %v143
    %v219 = vunpack.c.l.b16 %v144
    %v220 = vunpack.c.l.b16 %v145
    %v221 = vunpack.c.l.b16 %v146
    %v222 = vunpack.c.l.b16 %v147
    %v223 = vunpack.c.l.b16 %v148
    %v224 = vunpack.c.l.b16 %v149
    %v225 = vunpack.c.l.b16 %v150
    %v226 = vunpack.c.l.b16 %v151
    %v227 = vunpack.c.l.b16 %v152
    %v228 = vunpack.c.l.b16 %v153
    %v229 = vunpack.c.l.b16 %v154
    %v230 = vunpack.c.l.b16 %v155
    %v231 = vunpack.c.l.b16 %v156
    %v232 = vunpack.c.l.b16 %v157
    %v233 = vunpack.c.l.b16 %v158
    %v234 = vunpack.c.l.b16 %v159
    %v235 = vunpack.c.l.b16 %v160
    %v236 = vunpack.c.l.b16 %v161
    %v237 = vunpack.c.l.b16 %v162
    %v238 = vunpack.c.l.b16 %v163
    %v239 = vunpack.c.l.b16 %v164
    %v240 = vunpack.c.l.b16 %v165
    %v241 = vunpack.c.l.b16 %v166
    %v242 = vunpack.c.l.b16 %v167
    %v243 = vunpack.c.l.b16 %v168
    %v244 = vpack.c.b16 %v211, %v210
    %v245 = vpack.c.b16 %v213, %v212
    %v246 = vpack.c.b16 %v215, %v214
    %v247 = vpack.c.b16 %v217, %v216
    %v248 = vpack.c.b16 %v219, %v218
    %v249 = vpack.c.b16 %v221, %v220
    %v250 = vpack.c.b16 %v223, %v222
    %v251 = vpack.c.b16 %v225, %v224
    %v252 = vpack.c.b16 %v227, %v226
    %v253 = vpack.c.b16 %v229, %v228
    %v254 = vpack.c.b16 %v231, %v230
    %v255 = vpack.c.b16 %v233, %v232
    %v256 = vpack.c.b16 %v235, %v234
    %v257 = vpack.c.b16 %v237, %v236
    %v258 = vpack.c.b16 %v239, %v238
    %v259 = vpack.c.b16 %v241, %v240
    %v260 = vpack.c.b16 %v243, %v242
    %vm277 = vcmask 97280
    %v279 = vsel %vm277, %v134, 0
    %vm281 = vcmask 1045504
    %v283 = vsel %vm281, %v260, 0
    %285 = vmatprep.subr.bf16.mxu0 0
    %286 = vmatpush1.bf16.msra.mxu0 %v244
    %287 = vmatprep.subr.bf16.mxu0 0
    %288 = vmatpush1.bf16.msra.mxu0 %v245
    %289 = vmatprep.subr.bf16.mxu0 0
    %290 = vmatpush1.bf16.msra.mxu0 %v246
    %291 = vmatprep.subr.bf16.mxu0 0
    %292 = vmatpush1.bf16.msra.mxu0 %v247
    %293 = vmatprep.subr.bf16.mxu0 0
    %294 = vmatpush1.bf16.msra.mxu0 %v248
    %295 = vmatprep.subr.bf16.mxu0 0
    %296 = vmatpush1.bf16.msra.mxu0 %v249
    %297 = vmatprep.subr.bf16.mxu0 0
    %298 = vmatpush1.bf16.msra.mxu0 %v250
    %299 = vmatprep.subr.bf16.mxu0 0
    %300 = vmatpush1.bf16.msra.mxu0 %v251
    %301 = vmatprep.subr.bf16.mxu0 0
    %302 = vmatpush1.bf16.msra.mxu0 %v252
    %303 = vmatprep.subr.bf16.mxu0 0
    %304 = vmatpush1.bf16.msra.mxu0 %v253
    %305 = vmatprep.subr.bf16.mxu0 0
    %306 = vmatpush1.bf16.msra.mxu0 %v254
    %307 = vmatprep.subr.bf16.mxu0 0
    %308 = vmatpush1.bf16.msra.mxu0 %v255
    %309 = vmatprep.subr.bf16.mxu0 0
    %310 = vmatpush1.bf16.msra.mxu0 %v256
    %311 = vmatprep.subr.bf16.mxu0 0
    %312 = vmatpush1.bf16.msra.mxu0 %v257
    %313 = vmatprep.subr.bf16.mxu0 0
    %314 = vmatpush1.bf16.msra.mxu0 %v258
    %315 = vmatprep.subr.bf16.mxu0 0
    %316 = vmatpush1.bf16.msra.mxu0 %v259
    %317 = vmatprep.mubr.bf16.mxu0 %v133
    %318 = vmatmul.mubr.bf16.gmra.mrb[0].mxu0 %v132
    %v319 = vpop.f32.mrb[0].mxu0
    %v320 = vadd.f32 %v174, %v319
    %v321 = vpop.f32.mrb[0].mxu0
    %v322 = vpop.f32.mrb[0].mxu0
    %v323 = vadd.f32 %v174, %v322
    %v324 = vpop.f32.mrb[0].mxu0
    %325 = vdwg.mxu0
    %326 = vmatprep.subr.bf16.mxu0 0
    %327 = vmatpush1.bf16.msra.mxu0 %v283
    %328 = vmatprep.subr.bf16.mxu0 0
    %329 = vmatpush1.bf16.msra.mxu0 0
    %330 = vmatprep.subr.bf16.mxu0 0
    %331 = vmatpush1.bf16.msra.mxu0 0
    %332 = vmatprep.subr.bf16.mxu0 0
    %333 = vmatpush1.bf16.msra.mxu0 0
    %334 = vmatprep.subr.bf16.mxu0 0
    %335 = vmatpush1.bf16.msra.mxu0 0
    %336 = vmatprep.subr.bf16.mxu0 0
    %337 = vmatpush1.bf16.msra.mxu0 0
    %338 = vmatprep.subr.bf16.mxu0 0
    %339 = vmatpush1.bf16.msra.mxu0 0
    %340 = vmatprep.subr.bf16.mxu0 0
    %341 = vmatpush1.bf16.msra.mxu0 0
    %342 = vmatprep.subr.bf16.mxu0 0
    %343 = vmatpush1.bf16.msra.mxu0 0
    %344 = vmatprep.subr.bf16.mxu0 0
    %345 = vmatpush1.bf16.msra.mxu0 0
    %346 = vmatprep.subr.bf16.mxu0 0
    %347 = vmatpush1.bf16.msra.mxu0 0
    %348 = vmatprep.subr.bf16.mxu0 0
    %349 = vmatpush1.bf16.msra.mxu0 0
    %350 = vmatprep.subr.bf16.mxu0 0
    %351 = vmatpush1.bf16.msra.mxu0 0
    %352 = vmatprep.subr.bf16.mxu0 0
    %353 = vmatpush1.bf16.msra.mxu0 0
    %354 = vmatprep.subr.bf16.mxu0 0
    %355 = vmatpush1.bf16.msra.mxu0 0
    %356 = vmatprep.subr.bf16.mxu0 0
    %357 = vmatpush1.bf16.msra.mxu0 0
    %358 = vmatprep.mubr.bf16.mxu0 0
    %359 = vmatmul.mubr.bf16.gmra.mrb[0].mxu0 %v279
    %v360 = vpop.f32.mrb[0].mxu0
    %v361 = vadd.f32 %v320, %v360
    %v362 = vpop.f32.mrb[0].mxu0
    %v363 = vpop.f32.mrb[0].mxu0
    %v364 = vadd.f32 %v323, %v363
    %v365 = vpop.f32.mrb[0].mxu0
    %366 = vdwg.mxu0
    %v367 = vmax.f32 %v361, 0.0
    %v368 = vmax.f32 %v364, 0.0
    %v369 = vpack.c.bf16 %v368, %v367
    %v370 = vld [vmem:[%s3] sm:$0xf]
    %v371 = vld [vmem:[%s3 + $0x4] sm:$0xf]
    %v372 = vld [vmem:[%s3 + $0x8] sm:$0xf]
    %v373 = vld [vmem:[%s3 + $0xc] sm:$0xf]
    %v374 = vld [vmem:[%s3 + $0x10] sm:$0xf]
    %v375 = vld [vmem:[%s3 + $0x14] sm:$0xf]
    %v376 = vld [vmem:[%s3 + $0x18] sm:$0xf]
    %v377 = vld [vmem:[%s3 + $0x1c] sm:$0xf]
    %v378 = vld [vmem:[%s3 + $0x20] sm:$0xf]
    %v379 = vld [vmem:[%s3 + $0x24] sm:$0xf]
    %v380 = vld [vmem:[%s3 + $0x28] sm:$0xf]
    %v381 = vld [vmem:[%s3 + $0x2c] sm:$0xf]
    %v382 = vld [vmem:[%s3 + $0x30] sm:$0xf]
    %v383 = vld [vmem:[%s3 + $0x34] sm:$0xf]
    %v384 = vld [vmem:[%s3 + $0x38] sm:$0xf]
    %v385 = vld [vmem:[%s3 + $0x3c] sm:$0xf]
    %v386 = vld [vmem:[%s4] sm:$0x1]
    %v388 = vlaneseq
    %v389 = vshrl.u32 %v388, 7
    %v390 = vsub.s32 0, %v389
    %v391 = vrot.slane %v386, %v390
    %v409 = vunpack.c.l.b16 %v370
    %v410 = vunpack.c.l.b16 %v371
    %v411 = vunpack.c.l.b16 %v372
    %v412 = vunpack.c.l.b16 %v373
    %v413 = vunpack.c.l.b16 %v374
    %v414 = vunpack.c.l.b16 %v375
    %v415 = vunpack.c.l.b16 %v376
    %v416 = vunpack.c.l.b16 %v377
    %v417 = vunpack.c.l.b16 %v378
    %v418 = vunpack.c.l.b16 %v379
    %v419 = vunpack.c.l.b16 %v380
    %v420 = vunpack.c.l.b16 %v381
    %v421 = vunpack.c.l.b16 %v382
    %v422 = vunpack.c.l.b16 %v383
    %v423 = vunpack.c.l.b16 %v384
    %v424 = vunpack.c.l.b16 %v385
    %v425 = vpack.c.b16 %v410, %v409
    %v426 = vpack.c.b16 %v412, %v411
    %v427 = vpack.c.b16 %v414, %v413
    %v428 = vpack.c.b16 %v416, %v415
    %v429 = vpack.c.b16 %v418, %v417
    %v430 = vpack.c.b16 %v420, %v419
    %v431 = vpack.c.b16 %v422, %v421
    %v432 = vpack.c.b16 %v424, %v423
    %441 = vmatprep.subr.bf16.mxu0 0
    %442 = vmatpush1.bf16.msra.mxu0 %v425
    %443 = vmatprep.subr.bf16.mxu0 0
    %444 = vmatpush1.bf16.msra.mxu0 %v426
    %445 = vmatprep.subr.bf16.mxu0 0
    %446 = vmatpush1.bf16.msra.mxu0 %v427
    %447 = vmatprep.subr.bf16.mxu0 0
    %448 = vmatpush1.bf16.msra.mxu0 %v428
    %449 = vmatprep.subr.bf16.mxu0 0
    %450 = vmatpush1.bf16.msra.mxu0 %v429
    %451 = vmatprep.subr.bf16.mxu0 0
    %452 = vmatpush1.bf16.msra.mxu0 %v430
    %453 = vmatprep.subr.bf16.mxu0 0
    %454 = vmatpush1.bf16.msra.mxu0 %v431
    %455 = vmatprep.subr.bf16.mxu0 0
    %456 = vmatpush1.bf16.msra.mxu0 %v432
    %457 = vmatprep.subr.bf16.mxu0 0
    %458 = vmatpush1.bf16.msra.mxu0 0
    %459 = vmatprep.subr.bf16.mxu0 0
    %460 = vmatpush1.bf16.msra.mxu0 0
    %461 = vmatprep.subr.bf16.mxu0 0
    %462 = vmatpush1.bf16.msra.mxu0 0
    %463 = vmatprep.subr.bf16.mxu0 0
    %464 = vmatpush1.bf16.msra.mxu0 0
    %465 = vmatprep.subr.bf16.mxu0 0
    %466 = vmatpush1.bf16.msra.mxu0 0
    %467 = vmatprep.subr.bf16.mxu0 0
    %468 = vmatpush1.bf16.msra.mxu0 0
    %469 = vmatprep.subr.bf16.mxu0 0
    %470 = vmatpush1.bf16.msra.mxu0 0
    %471 = vmatprep.subr.bf16.mxu0 0
    %472 = vmatpush1.bf16.msra.mxu0 0
    %473 = vmatprep.mubr.bf16.mxu0 0
    %474 = vmatmul.mubr.bf16.gmra.mrb[0].mxu0 %v369
    %v475 = vpop.f32.mrb[0].mxu0
    %v476 = vadd.f32 %v391, %v475
    %v477 = vpop.f32.mrb[0].mxu0
    %v478 = vpop.f32.mrb[0].mxu0
    %v479 = vadd.f32 %v391, %v478
    %v480 = vpop.f32.mrb[0].mxu0
    %481 = vdwg.mxu0
    %v482 = vmax.f32 %v476, 0.0
    %v483 = vmax.f32 %v479, 0.0
    %v484 = vpack.c.bf16 %v483, %v482
    %v485 = vld [vmem:[%s5] sm:$0xf]
    %v486 = vld [vmem:[%s5 + $0x4] sm:$0xf]
    %v487 = vld [vmem:[%s5 + $0x8] sm:$0xf]
    %v488 = vld [vmem:[%s5 + $0xc] sm:$0xf]
    %v489 = vld [vmem:[%s5 + $0x10] sm:$0xf]
    %v490 = vld [vmem:[%s5 + $0x14] sm:$0xf]
    %v491 = vld [vmem:[%s5 + $0x18] sm:$0xf]
    %v492 = vld [vmem:[%s5 + $0x1c] sm:$0xf]
    %v493 = vld [vmem:[%s5 + $0x20] sm:$0xf]
    %v494 = vld [vmem:[%s5 + $0x24] sm:$0xf]
    %v495 = vld [vmem:[%s5 + $0x28] sm:$0xf]
    %v496 = vld [vmem:[%s5 + $0x2c] sm:$0xf]
    %v497 = vld [vmem:[%s5 + $0x30] sm:$0xf]
    %v498 = vld [vmem:[%s5 + $0x34] sm:$0xf]
    %v499 = vld [vmem:[%s5 + $0x38] sm:$0xf]
    %v500 = vld [vmem:[%s5 + $0x3c] sm:$0xf]
    %v501 = vld [vmem:[%s6] sm:$0x1]
    %v503 = vlaneseq
    %v504 = vshrl.u32 %v503, 7
    %v505 = vsub.s32 0, %v504
    %v506 = vrot.slane %v501, %v505
    %v524 = vunpack.c.l.b16 %v485
    %v525 = vunpack.c.l.b16 %v486
    %v526 = vunpack.c.l.b16 %v487
    %v527 = vunpack.c.l.b16 %v488
    %v528 = vunpack.c.l.b16 %v489
    %v529 = vunpack.c.l.b16 %v490
    %v530 = vunpack.c.l.b16 %v491
    %v531 = vunpack.c.l.b16 %v492
    %v532 = vunpack.c.l.b16 %v493
    %v533 = vunpack.c.l.b16 %v494
    %v534 = vunpack.c.l.b16 %v495
    %v535 = vunpack.c.l.b16 %v496
    %v536 = vunpack.c.l.b16 %v497
    %v537 = vunpack.c.l.b16 %v498
    %v538 = vunpack.c.l.b16 %v499
    %v539 = vunpack.c.l.b16 %v500
    %v540 = vpack.c.b16 %v525, %v524
    %v541 = vpack.c.b16 %v527, %v526
    %v542 = vpack.c.b16 %v529, %v528
    %v543 = vpack.c.b16 %v531, %v530
    %v544 = vpack.c.b16 %v533, %v532
    %v545 = vpack.c.b16 %v535, %v534
    %v546 = vpack.c.b16 %v537, %v536
    %v547 = vpack.c.b16 %v539, %v538
    %556 = vmatprep.subr.bf16.mxu0 0
    %557 = vmatpush1.bf16.msra.mxu0 %v540
    %558 = vmatprep.subr.bf16.mxu0 0
    %559 = vmatpush1.bf16.msra.mxu0 %v541
    %560 = vmatprep.subr.bf16.mxu0 0
    %561 = vmatpush1.bf16.msra.mxu0 %v542
    %562 = vmatprep.subr.bf16.mxu0 0
    %563 = vmatpush1.bf16.msra.mxu0 %v543
    %564 = vmatprep.subr.bf16.mxu0 0
    %565 = vmatpush1.bf16.msra.mxu0 %v544
    %566 = vmatprep.subr.bf16.mxu0 0
    %567 = vmatpush1.bf16.msra.mxu0 %v545
    %568 = vmatprep.subr.bf16.mxu0 0
    %569 = vmatpush1.bf16.msra.mxu0 %v546
    %570 = vmatprep.subr.bf16.mxu0 0
    %571 = vmatpush1.bf16.msra.mxu0 %v547
    %572 = vmatprep.subr.bf16.mxu0 0
    %573 = vmatpush1.bf16.msra.mxu0 0
    %574 = vmatprep.subr.bf16.mxu0 0
    %575 = vmatpush1.bf16.msra.mxu0 0
    %576 = vmatprep.subr.bf16.mxu0 0
    %577 = vmatpush1.bf16.msra.mxu0 0
    %578 = vmatprep.subr.bf16.mxu0 0
    %579 = vmatpush1.bf16.msra.mxu0 0
    %580 = vmatprep.subr.bf16.mxu0 0
    %581 = vmatpush1.bf16.msra.mxu0 0
    %582 = vmatprep.subr.bf16.mxu0 0
    %583 = vmatpush1.bf16.msra.mxu0 0
    %584 = vmatprep.subr.bf16.mxu0 0
    %585 = vmatpush1.bf16.msra.mxu0 0
    %586 = vmatprep.subr.bf16.mxu0 0
    %587 = vmatpush1.bf16.msra.mxu0 0
    %588 = vmatprep.mubr.bf16.mxu0 0
    %589 = vmatmul.mubr.bf16.gmra.mrb[0].mxu0 %v484
    %v590 = vpop.f32.mrb[0].mxu0
    %v591 = vadd.f32 %v506, %v590
    %v592 = vpop.f32.mrb[0].mxu0
    %v593 = vpop.f32.mrb[0].mxu0
    %v594 = vadd.f32 %v506, %v593
    %v595 = vpop.f32.mrb[0].mxu0
    %596 = vdwg.mxu0
    %v597 = vmax.f32 %v591, 0.0
    %v598 = vmax.f32 %v594, 0.0
    %v599 = vpack.c.bf16 %v598, %v597
    %v600 = vld [vmem:[%s7] sm:$0xf]
    %v601 = vld [vmem:[%s7 + $0x4] sm:$0xf]
    %v602 = vld [vmem:[%s7 + $0x8] sm:$0xf]
    %v603 = vld [vmem:[%s7 + $0xc] sm:$0xf]
    %v604 = vld [vmem:[%s7 + $0x10] sm:$0xf]
    %v605 = vld [vmem:[%s7 + $0x14] sm:$0xf]
    %v606 = vld [vmem:[%s7 + $0x18] sm:$0xf]
    %v607 = vld [vmem:[%s7 + $0x1c] sm:$0xf]
    %v608 = vld [vmem:[%s7 + $0x20] sm:$0xf]
    %v609 = vld [vmem:[%s7 + $0x24] sm:$0xf]
    %v610 = vld [vmem:[%s7 + $0x28] sm:$0xf]
    %v611 = vld [vmem:[%s7 + $0x2c] sm:$0xf]
    %v612 = vld [vmem:[%s7 + $0x30] sm:$0xf]
    %v613 = vld [vmem:[%s7 + $0x34] sm:$0xf]
    %v614 = vld [vmem:[%s7 + $0x38] sm:$0xf]
    %v615 = vld [vmem:[%s7 + $0x3c] sm:$0xf]
    %v616 = vld [vmem:[%s8] sm:$0x1]
    %v618 = vlaneseq
    %v619 = vshrl.u32 %v618, 7
    %v620 = vsub.s32 0, %v619
    %v621 = vrot.slane %v616, %v620
    %v639 = vunpack.c.l.b16 %v600
    %v640 = vunpack.c.l.b16 %v601
    %v641 = vunpack.c.l.b16 %v602
    %v642 = vunpack.c.l.b16 %v603
    %v643 = vunpack.c.l.b16 %v604
    %v644 = vunpack.c.l.b16 %v605
    %v645 = vunpack.c.l.b16 %v606
    %v646 = vunpack.c.l.b16 %v607
    %v647 = vunpack.c.l.b16 %v608
    %v648 = vunpack.c.l.b16 %v609
    %v649 = vunpack.c.l.b16 %v610
    %v650 = vunpack.c.l.b16 %v611
    %v651 = vunpack.c.l.b16 %v612
    %v652 = vunpack.c.l.b16 %v613
    %v653 = vunpack.c.l.b16 %v614
    %v654 = vunpack.c.l.b16 %v615
    %v655 = vpack.c.b16 %v640, %v639
    %v656 = vpack.c.b16 %v642, %v641
    %v657 = vpack.c.b16 %v644, %v643
    %v658 = vpack.c.b16 %v646, %v645
    %v659 = vpack.c.b16 %v648, %v647
    %v660 = vpack.c.b16 %v650, %v649
    %v661 = vpack.c.b16 %v652, %v651
    %v662 = vpack.c.b16 %v654, %v653
    %671 = vmatprep.subr.bf16.mxu0 0
    %672 = vmatpush1.bf16.msra.mxu0 %v655
    %673 = vmatprep.subr.bf16.mxu0 0
    %674 = vmatpush1.bf16.msra.mxu0 %v656
    %675 = vmatprep.subr.bf16.mxu0 0
    %676 = vmatpush1.bf16.msra.mxu0 %v657
    %677 = vmatprep.subr.bf16.mxu0 0
    %678 = vmatpush1.bf16.msra.mxu0 %v658
    %679 = vmatprep.subr.bf16.mxu0 0
    %680 = vmatpush1.bf16.msra.mxu0 %v659
    %681 = vmatprep.subr.bf16.mxu0 0
    %682 = vmatpush1.bf16.msra.mxu0 %v660
    %683 = vmatprep.subr.bf16.mxu0 0
    %684 = vmatpush1.bf16.msra.mxu0 %v661
    %685 = vmatprep.subr.bf16.mxu0 0
    %686 = vmatpush1.bf16.msra.mxu0 %v662
    %687 = vmatprep.subr.bf16.mxu0 0
    %688 = vmatpush1.bf16.msra.mxu0 0
    %689 = vmatprep.subr.bf16.mxu0 0
    %690 = vmatpush1.bf16.msra.mxu0 0
    %691 = vmatprep.subr.bf16.mxu0 0
    %692 = vmatpush1.bf16.msra.mxu0 0
    %693 = vmatprep.subr.bf16.mxu0 0
    %694 = vmatpush1.bf16.msra.mxu0 0
    %695 = vmatprep.subr.bf16.mxu0 0
    %696 = vmatpush1.bf16.msra.mxu0 0
    %697 = vmatprep.subr.bf16.mxu0 0
    %698 = vmatpush1.bf16.msra.mxu0 0
    %699 = vmatprep.subr.bf16.mxu0 0
    %700 = vmatpush1.bf16.msra.mxu0 0
    %701 = vmatprep.subr.bf16.mxu0 0
    %702 = vmatpush1.bf16.msra.mxu0 0
    %703 = vmatprep.mubr.bf16.mxu0 0
    %704 = vmatmul.mubr.bf16.gmra.mrb[0].mxu0 %v599
    %v705 = vpop.f32.mrb[0].mxu0
    %v706 = vadd.f32 %v621, %v705
    %v707 = vpop.f32.mrb[0].mxu0
    %v708 = vpop.f32.mrb[0].mxu0
    %v709 = vadd.f32 %v621, %v708
    %v710 = vpop.f32.mrb[0].mxu0
    %711 = vdwg.mxu0
    %v712 = vmax.f32 %v706, 0.0
    %v713 = vmax.f32 %v709, 0.0
    %v714 = vpack.c.bf16 %v713, %v712
    %v715 = vld [vmem:[%s9] sm:$0xf]
    %v716 = vld [vmem:[%s9 + $0x4] sm:$0xf]
    %v717 = vld [vmem:[%s9 + $0x8] sm:$0xf]
    %v718 = vld [vmem:[%s9 + $0xc] sm:$0xf]
    %v719 = vld [vmem:[%s9 + $0x10] sm:$0xf]
    %v720 = vld [vmem:[%s9 + $0x14] sm:$0xf]
    %v721 = vld [vmem:[%s9 + $0x18] sm:$0xf]
    %v722 = vld [vmem:[%s9 + $0x1c] sm:$0xf]
    %v723 = vld [vmem:[%s9 + $0x20] sm:$0xf]
    %v724 = vld [vmem:[%s9 + $0x24] sm:$0xf]
    %v725 = vld [vmem:[%s9 + $0x28] sm:$0xf]
    %v726 = vld [vmem:[%s9 + $0x2c] sm:$0xf]
    %v727 = vld [vmem:[%s9 + $0x30] sm:$0xf]
    %v728 = vld [vmem:[%s9 + $0x34] sm:$0xf]
    %v729 = vld [vmem:[%s9 + $0x38] sm:$0xf]
    %v730 = vld [vmem:[%s9 + $0x3c] sm:$0xf]
    %v731 = vld [vmem:[%s10] sm:$0x1]
    %v733 = vlaneseq
    %v734 = vshrl.u32 %v733, 7
    %v735 = vsub.s32 0, %v734
    %v736 = vrot.slane %v731, %v735
    %v754 = vunpack.c.l.b16 %v715
    %v755 = vunpack.c.l.b16 %v716
    %v756 = vunpack.c.l.b16 %v717
    %v757 = vunpack.c.l.b16 %v718
    %v758 = vunpack.c.l.b16 %v719
    %v759 = vunpack.c.l.b16 %v720
    %v760 = vunpack.c.l.b16 %v721
    %v761 = vunpack.c.l.b16 %v722
    %v762 = vunpack.c.l.b16 %v723
    %v763 = vunpack.c.l.b16 %v724
    %v764 = vunpack.c.l.b16 %v725
    %v765 = vunpack.c.l.b16 %v726
    %v766 = vunpack.c.l.b16 %v727
    %v767 = vunpack.c.l.b16 %v728
    %v768 = vunpack.c.l.b16 %v729
    %v769 = vunpack.c.l.b16 %v730
    %v770 = vpack.c.b16 %v755, %v754
    %v771 = vpack.c.b16 %v757, %v756
    %v772 = vpack.c.b16 %v759, %v758
    %v773 = vpack.c.b16 %v761, %v760
    %v774 = vpack.c.b16 %v763, %v762
    %v775 = vpack.c.b16 %v765, %v764
    %v776 = vpack.c.b16 %v767, %v766
    %v777 = vpack.c.b16 %v769, %v768
    %786 = vmatprep.subr.bf16.mxu0 0
    %787 = vmatpush1.bf16.msra.mxu0 %v770
    %788 = vmatprep.subr.bf16.mxu0 0
    %789 = vmatpush1.bf16.msra.mxu0 %v771
    %790 = vmatprep.subr.bf16.mxu0 0
    %791 = vmatpush1.bf16.msra.mxu0 %v772
    %792 = vmatprep.subr.bf16.mxu0 0
    %793 = vmatpush1.bf16.msra.mxu0 %v773
    %794 = vmatprep.subr.bf16.mxu0 0
    %795 = vmatpush1.bf16.msra.mxu0 %v774
    %796 = vmatprep.subr.bf16.mxu0 0
    %797 = vmatpush1.bf16.msra.mxu0 %v775
    %798 = vmatprep.subr.bf16.mxu0 0
    %799 = vmatpush1.bf16.msra.mxu0 %v776
    %800 = vmatprep.subr.bf16.mxu0 0
    %801 = vmatpush1.bf16.msra.mxu0 %v777
    %802 = vmatprep.subr.bf16.mxu0 0
    %803 = vmatpush1.bf16.msra.mxu0 0
    %804 = vmatprep.subr.bf16.mxu0 0
    %805 = vmatpush1.bf16.msra.mxu0 0
    %806 = vmatprep.subr.bf16.mxu0 0
    %807 = vmatpush1.bf16.msra.mxu0 0
    %808 = vmatprep.subr.bf16.mxu0 0
    %809 = vmatpush1.bf16.msra.mxu0 0
    %810 = vmatprep.subr.bf16.mxu0 0
    %811 = vmatpush1.bf16.msra.mxu0 0
    %812 = vmatprep.subr.bf16.mxu0 0
    %813 = vmatpush1.bf16.msra.mxu0 0
    %814 = vmatprep.subr.bf16.mxu0 0
    %815 = vmatpush1.bf16.msra.mxu0 0
    %816 = vmatprep.subr.bf16.mxu0 0
    %817 = vmatpush1.bf16.msra.mxu0 0
    %818 = vmatprep.mubr.bf16.mxu0 0
    %819 = vmatmul.mubr.bf16.gmra.mrb[0].mxu0 %v714
    %v820 = vpop.f32.mrb[0].mxu0
    %v821 = vadd.f32 %v736, %v820
    %v822 = vpop.f32.mrb[0].mxu0
    %v823 = vpop.f32.mrb[0].mxu0
    %v824 = vadd.f32 %v736, %v823
    %v825 = vpop.f32.mrb[0].mxu0
    %826 = vdwg.mxu0
    %vm827 = vcmask 31744
    %828 = vst.msk [vmem:[#allocation2] sm:$0xff] %vm827, %v821
    %829 = vst.msk [vmem:[#allocation2 + $0x8] sm:$0xff] %vm827, %v824
    // Predicated region
    $region46: #{dqn_forward.1} parent=1 // pred_check
      _
    $region47: #{dqn_forward.1} parent=1 // pred_check_branch
      %831 = sbr.rel (0) target = $region49
    $region48: #{dqn_forward.1} parent=1 // pred_region
      %s833 = ssub.s32 256, 32
      %834 = vsyncadd [#allocation3], %s833
      %s835 = sshll.u32 [#allocation2], 4
      %s836 = int_to_ptr.vmem [resolvable:$true] %s835
      %841 = dma.vmem_to_hbm [thread:$0]  %s836, 32, %s11, [#allocation3], 32, 32, 2
    $region49: #{dqn_forward.1} parent=1 // pred_fallthru
      _
    // Predicated region
    $region50: #{dqn_forward.1} parent=1 // pred_check
      _
    $region51: #{dqn_forward.1} parent=1 // pred_check_branch
      %843 = sbr.rel (0) target = $region53
    $region52: #{dqn_forward.1} parent=1 // pred_region
      %844 = dma.done [#allocation3], 256
    $region53: #{dqn_forward.1} parent=1 // pred_fallthru
      _
    %845 = vsyncpa [#allocation3], 1

</llo_original>
